<compile_context>
chip_gen: v5e
topology: v5e:2x2
jax: 0.10.0
libtpu: 0.0.40
codegen_flags: <defaults>
</compile_context>

<pallas_src>
import math

import jax
import jax.numpy as jnp
from jax.experimental import pallas as pl
from jax.experimental.pallas import tpu as pltpu


def _round_up(n, m):
    return ((n + m - 1) // m) * m


# ----------------------------- Pallas kernel --------------------------------
def dnn_kernel(xcat_ref, w1t_ref, b1t_ref, w2t_ref, b2t_ref, out_ref):
    """Feature-major MLP step on one batch tile.

    xcat_ref : (din,    TB)  compute_dtype   -- [x; time_emb; e]^T tile
    w1t_ref  : (hidden, din) compute_dtype   -- fused layer-1 weight (emb folded)
    b1t_ref  : (hidden, 1)   f32
    w2t_ref  : (dout, hidden) compute_dtype
    b2t_ref  : (dout, 1)     f32
    out_ref  : (dout,  TB)   f32
    """
    # layer 1: h = tanh(W1^T @ xcat + b1)   (MXU, f32 accumulation)
    h = jnp.dot(w1t_ref[...], xcat_ref[...],
                preferred_element_type=jnp.float32)
    h = jnp.tanh(h + b1t_ref[...])                      # f32 VPU/EUP path

    # layer 2 (final activation popped in the reference module)
    out = jnp.dot(w2t_ref[...], h.astype(w2t_ref.dtype),
                  preferred_element_type=jnp.float32)
    out_ref[...] = (out + b2t_ref[...]).astype(out_ref.dtype)


# ------------------------------ glue (JAX) -----------------------------------
def timestep_embedding(timesteps, dim, max_period=10000):
    """Sinusoidal timestep embedding, matches the PyTorch reference."""
    half = dim // 2
    freqs = jnp.exp(-math.log(max_period)
                    * jnp.arange(half, dtype=jnp.float32) / half)
    args = timesteps[:, None].astype(jnp.float32) * freqs[None, :]
    embedding = jnp.concatenate([jnp.cos(args), jnp.sin(args)], axis=-1)
    if dim % 2:
        embedding = jnp.concatenate(
            [embedding, jnp.zeros_like(embedding[:, :1])], axis=-1)
    return embedding


def xavier_normal(key, fan_in, fan_out):
    std = math.sqrt(2.0 / (fan_in + fan_out))
    return std * jax.random.normal(key, (fan_in, fan_out), dtype=jnp.float32)


def make_params(key, dx, emb_size, env_size, hidden, dout):
    ks = jax.random.split(key, 4)
    params = dict(
        # emb_layer: Linear(emb_size, emb_size)
        w_emb=xavier_normal(ks[0], emb_size, emb_size),
        b_emb=jnp.zeros((1, emb_size), jnp.float32),
        b1=jnp.zeros((1, hidden), jnp.float32),
        # out_layers[0]: Linear(hidden, dout)
        w2=xavier_normal(ks[3], hidden, dout),
        b2=jnp.zeros((1, dout), jnp.float32),
    )
    # in_layers[0]: Linear(dx + emb + env, hidden) -- one xavier draw over the
    # full fan_in (same semantics as the PyTorch Linear), then split by input.
    w1_full = xavier_normal(ks[2], dx + emb_size + env_size, hidden)
    params["w1x"] = w1_full[:dx]
    params["w1emb"] = w1_full[dx:dx + emb_size]
    params["w1e"] = w1_full[dx + emb_size:]
    return params


def dnn_forward(x, timesteps, e, params, emb_size,
                compute_dtype=jnp.bfloat16, batch_tile=1024):
    B, dx = x.shape
    env = e.shape[1]
    hidden = params["w1x"].shape[1]
    dout = params["w2"].shape[1]
    din = dx + emb_size + env

    # ----- trace-time algebra & packing (cheap, done once per call) ---------
    time_emb = timestep_embedding(timesteps, emb_size)

    # Fold emb_layer into layer-1 (exact: emb_layer has no activation):
    #   emb @ W1emb = time_emb @ (Wemb @ W1emb) + b_emb @ W1emb
    w1emb_eff = params["w_emb"] @ params["w1emb"]
    b1_eff = params["b1"] + params["b_emb"] @ params["w1emb"]
    w1_eff = jnp.concatenate([params["w1x"], w1emb_eff, params["w1e"]], axis=0)

    # Pre-concat the three inputs -> one K=din matmul in the kernel.
    xcat = jnp.concatenate([x, time_emb, e], axis=-1).astype(compute_dtype)

    # Batch tiling: batch goes on the lane axis (lane-dense output slab).
    tb = min(batch_tile, _round_up(B, 128))
    b_pad = _round_up(B, tb)
    if b_pad != B:
        xcat = jnp.pad(xcat, ((0, b_pad - B), (0, 0)))
    xcat_t = xcat.T                                       # (din, b_pad)

    w1t = w1_eff.T.astype(compute_dtype)                  # (hidden, din)
    w2t = params["w2"].T.astype(compute_dtype)            # (dout, hidden)
    b1t = b1_eff.reshape(hidden, 1).astype(jnp.float32)   # (hidden, 1)
    b2t = params["b2"].reshape(dout, 1).astype(jnp.float32)

    const = lambda i: (0, 0)   # weights/biases VMEM-resident across the grid
    out_t = pl.pallas_call(
        dnn_kernel,
        out_shape=jax.ShapeDtypeStruct((dout, b_pad), jnp.float32),
        grid_spec=pltpu.PrefetchScalarGridSpec(
            num_scalar_prefetch=0,
            grid=(b_pad // tb,),
            in_specs=[
                pl.BlockSpec((din, tb), lambda i: (0, i)),     # activations
                pl.BlockSpec((hidden, din), const),            # W1^T (fused)
                pl.BlockSpec((hidden, 1), const),              # b1_eff
                pl.BlockSpec((dout, hidden), const),           # W2^T
                pl.BlockSpec((dout, 1), const),                # b2
            ],
            out_specs=pl.BlockSpec((dout, tb), lambda i: (0, i)),
        ),
        compiler_params=pltpu.CompilerParams(
            dimension_semantics=("parallel",)),
    )(xcat_t, w1t, b1t, w2t, b2t)

    return out_t.T[:B]


def dnn_reference(x, timesteps, e, params, emb_size,
                  compute_dtype=jnp.bfloat16):
    """Pure-JAX reference (module math, no folding / no transpose).

    Matmul operands are cast to the same compute dtype as the kernel so the
    comparison is like-for-like; accumulation stays f32.
    """
    time_emb = timestep_embedding(timesteps, emb_size)
    emb = time_emb @ params["w_emb"] + params["b_emb"]
    h = jnp.concatenate([x, emb, e], axis=-1)
    w1 = jnp.concatenate(
        [params["w1x"], params["w1emb"], params["w1e"]], axis=0)
    h = jnp.dot(h.astype(compute_dtype), w1.astype(compute_dtype),
                preferred_element_type=jnp.float32) + params["b1"]
    h = jnp.tanh(h)
    out = jnp.dot(h.astype(compute_dtype), params["w2"].astype(compute_dtype),
                  preferred_element_type=jnp.float32) + params["b2"]
    return out


# --------------------------------- main ---------------------------------------
if __name__ == "__main__":
    # small shapes consistent with the module:
    #   in_dims=[16,32], out_dims=[32,16], emb_size=8, env_size=4, tanh
    B, DX, EMB, ENV, HID, DOUT = 2, 16, 8, 4, 32, 16

    key = jax.random.PRNGKey(0)
    kx, ke, kt, kp = jax.random.split(key, 4)

    x = jax.random.normal(kx, (B, DX), dtype=jnp.float32)
    e = jax.random.normal(ke, (B, ENV), dtype=jnp.float32)
    timesteps = jax.random.randint(kt, (B,), 0, 1000).astype(jnp.float32)

    params = make_params(kp, DX, EMB, ENV, HID, DOUT)

    out = dnn_forward(x, timesteps, e, params, EMB)
    out = jax.block_until_ready(out)

    ref = dnn_reference(x, timesteps, e, params, EMB)
    assert out.shape == (B, DOUT)
    assert jnp.allclose(out, ref, atol=2e-2, rtol=2e-2), \
        "mismatch vs JAX reference"

    print("KERNEL_OK")
</pallas_src>

<mosaic_0001>
module attributes {stable_mosaic.version = 11 : i64} {
  func.func @dnn_kernel(%arg0: i32, %arg1: memref<28x128xbf16, #tpu.memory_space<vmem>>, %arg2: memref<32x28xbf16, #tpu.memory_space<vmem>>, %arg3: memref<32x1xf32, #tpu.memory_space<vmem>>, %arg4: memref<16x32xbf16, #tpu.memory_space<vmem>>, %arg5: memref<16x1xf32, #tpu.memory_space<vmem>>, %arg6: memref<16x128xf32, #tpu.memory_space<vmem>>) attributes {dimension_semantics = [#tpu.dimension_semantics<parallel>], iteration_bounds = array<i64: 1>, scalar_prefetch = 0 : i64, scratch_operands = 0 : i64, tpu.core_type = #tpu.core_type<tc>, window_params = [{transform_indices = @transform_0, window_bounds = array<i64: 28, 128>}, {pipeline_mode = #tpu.pipeline_mode<synchronous>, transform_indices = @transform_1, window_bounds = array<i64: 32, 28>}, {pipeline_mode = #tpu.pipeline_mode<synchronous>, transform_indices = @transform_2, window_bounds = array<i64: 32, 1>}, {pipeline_mode = #tpu.pipeline_mode<synchronous>, transform_indices = @transform_3, window_bounds = array<i64: 16, 32>}, {pipeline_mode = #tpu.pipeline_mode<synchronous>, transform_indices = @transform_4, window_bounds = array<i64: 16, 1>}, {transform_indices = @transform_5, window_bounds = array<i64: 16, 128>}]} {
    %c0 = arith.constant 0 : index
    %c0_0 = arith.constant 0 : index
    %0 = vector.load %arg2[%c0, %c0_0] : memref<32x28xbf16, #tpu.memory_space<vmem>>, vector<32x28xbf16>
    %c0_1 = arith.constant 0 : index
    %c0_2 = arith.constant 0 : index
    %1 = vector.load %arg1[%c0_1, %c0_2] : memref<28x128xbf16, #tpu.memory_space<vmem>>, vector<28x128xbf16>
    %cst = arith.constant dense<0.000000e+00> : vector<32x128xf32>
    %2 = tpu.matmul %0, %1, %cst {dimension_numbers = #tpu.dot_dimension_numbers<[1], [0], [0], [1], [0, 0, 1, 1], [], []>} : vector<32x28xbf16>, vector<28x128xbf16>, vector<32x128xf32> -> vector<32x128xf32>
    %c0_3 = arith.constant 0 : index
    %c0_4 = arith.constant 0 : index
    %3 = vector.load %arg3[%c0_3, %c0_4] : memref<32x1xf32, #tpu.memory_space<vmem>>, vector<32x1xf32>
    %4 = vector.broadcast %3 : vector<32x1xf32> to vector<32x128xf32>
    %5 = arith.addf %2, %4 : vector<32x128xf32>
    %6 = math.tanh %5 : vector<32x128xf32>
    %c0_5 = arith.constant 0 : index
    %c0_6 = arith.constant 0 : index
    %7 = vector.load %arg4[%c0_5, %c0_6] : memref<16x32xbf16, #tpu.memory_space<vmem>>, vector<16x32xbf16>
    %8 = arith.truncf %6 : vector<32x128xf32> to vector<32x128xbf16>
    %cst_7 = arith.constant dense<0.000000e+00> : vector<16x128xf32>
    %9 = tpu.matmul %7, %8, %cst_7 {dimension_numbers = #tpu.dot_dimension_numbers<[1], [0], [0], [1], [0, 0, 1, 1], [], []>} : vector<16x32xbf16>, vector<32x128xbf16>, vector<16x128xf32> -> vector<16x128xf32>
    %c0_8 = arith.constant 0 : index
    %c0_9 = arith.constant 0 : index
    %10 = vector.load %arg5[%c0_8, %c0_9] : memref<16x1xf32, #tpu.memory_space<vmem>>, vector<16x1xf32>
    %11 = vector.broadcast %10 : vector<16x1xf32> to vector<16x128xf32>
    %12 = arith.addf %9, %11 : vector<16x128xf32>
    %c0_10 = arith.constant 0 : index
    %c0_11 = arith.constant 0 : index
    %13 = vector.load %arg6[%c0_10, %c0_11] : memref<16x128xf32, #tpu.memory_space<vmem>>, vector<16x128xf32>
    tpu.vector_store %arg6[%c0_10, %c0_11], %12 {strides = array<i32>} : memref<16x128xf32, #tpu.memory_space<vmem>>, vector<16x128xf32>,
    return
  }
  func.func @transform_0(%arg0: i32) -> (i32, i32) {
    %c0_i32 = arith.constant 0 : i32
    %c0_i32_0 = arith.constant 0 : i32
    return %c0_i32, %arg0 : i32, i32
  }
  func.func @transform_1(%arg0: i32) -> (i32, i32) {
    %c0_i32 = arith.constant 0 : i32
    %c0_i32_0 = arith.constant 0 : i32
    %c0_i32_1 = arith.constant 0 : i32
    return %c0_i32, %c0_i32_0 : i32, i32
  }
  func.func @transform_2(%arg0: i32) -> (i32, i32) {
    %c0_i32 = arith.constant 0 : i32
    %c0_i32_0 = arith.constant 0 : i32
    %c0_i32_1 = arith.constant 0 : i32
    return %c0_i32, %c0_i32_0 : i32, i32
  }
  func.func @transform_3(%arg0: i32) -> (i32, i32) {
    %c0_i32 = arith.constant 0 : i32
    %c0_i32_0 = arith.constant 0 : i32
    %c0_i32_1 = arith.constant 0 : i32
    return %c0_i32, %c0_i32_0 : i32, i32
  }
  func.func @transform_4(%arg0: i32) -> (i32, i32) {
    %c0_i32 = arith.constant 0 : i32
    %c0_i32_0 = arith.constant 0 : i32
    %c0_i32_1 = arith.constant 0 : i32
    return %c0_i32, %c0_i32_0 : i32, i32
  }
  func.func @transform_5(%arg0: i32) -> (i32, i32) {
    %c0_i32 = arith.constant 0 : i32
    %c0_i32_0 = arith.constant 0 : i32
    return %c0_i32, %arg0 : i32, i32
  }
}

</mosaic_0001>

<llo_original>
// kernel: tpu_custom_call.1
$region0: #{tpu_custom_call.1}
  #allocation0 [shape = 'u32[]', space=smem, size = 0x4, offset = 0x4, fixed_abs, tag = 'smem constant byte address 0x4 - core index']
  #allocation1 [shape = 'u32[72,128]{1,0:T(1,128)}', space=vmem, size = 0x9000, scoped, tag = 'internal scratch']
  %s0 = inlined_call_operand.vmem [shape: bf16[28,128], index: 0, kind: input, shape index: {}]
  %s1 = inlined_call_operand.vmem [shape: bf16[32,28], index: 1, kind: input, shape index: {}]
  %s2 = inlined_call_operand.vmem [shape: f32[32,1], index: 2, kind: input, shape index: {}]
  %s3 = inlined_call_operand.vmem [shape: bf16[16,32], index: 3, kind: input, shape index: {}]
  %s4 = inlined_call_operand.vmem [shape: f32[16,1], index: 4, kind: input, shape index: {}]
  %s5 = inlined_call_operand.hbm [shape: f32[16,128], index: 5, kind: output, shape index: {}]
  %s6 = sld [smem:[#allocation0]]
  $region30: #{tpu_custom_call.1} parent=0
    _
  %s8 = ssub.s32 1, %s6
  %s9 = scalar_select 0, %s8, %s6
  $region1: #{tpu_custom_call.1} parent=0
    #allocation2 [shape = 'u8[8192]{0}', space=vmem, size = 0x2000, scoped, tag = 'output window, operand 0, single buffered']
    #allocation3 [shape = 's32[1]{0}', space=sflag, size = 0x4, scoped, tag = 'scoped memory for tpu_custom_call.1']
    %10 = vsyncpa [#allocation3], 0
    // Predicated region
    $region2: #{tpu_custom_call.1} parent=1 // pred_check
      _
    $region3: #{tpu_custom_call.1} parent=1 // pred_check_branch
      %12 = sbr.rel (0) target = $region5
    $region4: #{tpu_custom_call.1} parent=1 // pred_region
      _
    $region5: #{tpu_custom_call.1} parent=1 // pred_fallthru
      _
    // Predicated region
    $region6: #{tpu_custom_call.1} parent=1 // pred_check
      _
    $region7: #{tpu_custom_call.1} parent=1 // pred_check_branch
      %14 = sbr.rel (0) target = $region9
    $region8: #{tpu_custom_call.1} parent=1 // pred_region
      _
    $region9: #{tpu_custom_call.1} parent=1 // pred_fallthru
      _
    // Predicated region
    $region10: #{tpu_custom_call.1} parent=1 // pred_check
      _
    $region11: #{tpu_custom_call.1} parent=1 // pred_check_branch
      %16 = sbr.rel (0) target = $region13
    $region12: #{tpu_custom_call.1} parent=1 // pred_region
      _
    $region13: #{tpu_custom_call.1} parent=1 // pred_fallthru
      _
    // Predicated region
    $region14: #{tpu_custom_call.1} parent=1 // pred_check
      _
    $region15: #{tpu_custom_call.1} parent=1 // pred_check_branch
      %18 = sbr.rel (0) target = $region17
    $region16: #{tpu_custom_call.1} parent=1 // pred_region
      _
    $region17: #{tpu_custom_call.1} parent=1 // pred_fallthru
      _
    // Predicated region
    $region18: #{tpu_custom_call.1} parent=1 // pred_check
      _
    $region19: #{tpu_custom_call.1} parent=1 // pred_check_branch
      %20 = sbr.rel (0) target = $region21
    $region20: #{tpu_custom_call.1} parent=1 // pred_region
      _
    $region21: #{tpu_custom_call.1} parent=1 // pred_fallthru
      _
    %v22 = vld [vmem:[%s1] sm:$0xf]
    %v23 = vld [vmem:[%s1 + $0x4] sm:$0xf]
    %v24 = vld [vmem:[%s1 + $0x8] sm:$0xf]
    %v25 = vld [vmem:[%s1 + $0xc] sm:$0xf]
    %v26 = vld [vmem:[%s0] sm:$0xf]
    %v27 = vld [vmem:[%s0 + $0x4] sm:$0xf]
    %v28 = vld [vmem:[%s0 + $0x8] sm:$0xf]
    %v29 = vld [vmem:[%s0 + $0xc] sm:$0x3]
    %v30 = vld [vmem:[%s2] sm:$0xff]
    %v31 = vld [vmem:[%s2 + $0x8] sm:$0xff]
    %v32 = vld [vmem:[%s2 + $0x10] sm:$0xff]
    %v33 = vld [vmem:[%s2 + $0x18] sm:$0xff]
    %35 = vset.pattern.permute.xlu0 0
    %36 = vperm.xlu0 %35, %v30
    %v37 = vpop.permute.xlu0 %36
    %40 = vset.pattern.permute.xlu0 0
    %41 = vperm.xlu0 %40, %v31
    %v42 = vpop.permute.xlu0 %41
    %45 = vset.pattern.permute.xlu0 0
    %46 = vperm.xlu0 %45, %v32
    %v47 = vpop.permute.xlu0 %46
    %50 = vset.pattern.permute.xlu0 0
    %51 = vperm.xlu0 %50, %v33
    %v52 = vpop.permute.xlu0 %51
    %v58 = vunpack.c.l.b16 %v22
    %v59 = vunpack.c.l.b16 %v23
    %v60 = vunpack.c.l.b16 %v24
    %v61 = vunpack.c.l.b16 %v25
    %v62 = vpack.c.b16 %v59, %v58
    %v63 = vpack.c.b16 %v61, %v60
    %v68 = vunpack.c.l.b16 %v26
    %v69 = vunpack.c.l.b16 %v27
    %v70 = vunpack.c.l.b16 %v28
    %v71 = vunpack.c.l.b16 %v29
    %v72 = vpack.c.b16 %v69, %v68
    %v73 = vpack.c.b16 %v71, %v70
    %vm75 = vcmask 228352
    %v77 = vsel %vm75, %v62, 0
    %v80 = vsel %vm75, %v63, 0
    %vm82 = vcmask 1045504
    %v84 = vsel %vm82, %v73, 0
    %86 = vmatpush.bf16.msra.mxu0 0
    %87 = vmatpush.bf16.msra.mxu0 0
    %88 = vmatpush.bf16.msra.mxu0 0
    %89 = vmatpush.bf16.msra.mxu0 0
    %90 = vmatpush.bf16.msra.mxu0 0
    %91 = vmatpush.bf16.msra.mxu0 0
    %92 = vmatpush.bf16.msra.mxu0 %v84
    %93 = vmatpush.bf16.msra.mxu0 %v72
    %94 = vmatmul.bf16.gmra.mxu0 %v77
    %v95 = vpop.f32.mrf.mxu0
    %v96 = vadd.f32 %v37, %v95
    %v97 = vpop.f32.mrf.mxu0
    %v98 = vadd.f32 %v42, %v97
    %99 = vmatmul.bf16.gmra.mxu0 %v80
    %v100 = vpop.f32.mrf.mxu0
    %v101 = vadd.f32 %v47, %v100
    %v102 = vpop.f32.mrf.mxu0
    %v103 = vadd.f32 %v52, %v102
    %104 = vdwg.mxu0
    %v105 = vtanh.pop %v96
    %v106 = vtanh.pop %v98
    %v107 = vtanh.pop %v101
    %v108 = vtanh.pop %v103
    %v109 = vld [vmem:[%s3] sm:$0xf]
    %v110 = vld [vmem:[%s3 + $0x4] sm:$0xf]
    %v111 = vpack.c.bf16 %v106, %v105
    %v112 = vpack.c.bf16 %v108, %v107
    %v113 = vld [vmem:[%s4] sm:$0xff]
    %v114 = vld [vmem:[%s4 + $0x8] sm:$0xff]
    %116 = vset.pattern.permute.xlu0 0
    %117 = vperm.xlu0 %116, %v113
    %v118 = vpop.permute.xlu0 %117
    %121 = vset.pattern.permute.xlu0 0
    %122 = vperm.xlu0 %121, %v114
    %v123 = vpop.permute.xlu0 %122
    %v127 = vunpack.c.l.b16 %v109
    %v128 = vunpack.c.l.b16 %v110
    %v129 = vpack.c.b16 %v128, %v127
    %vm130 = vcmask 261120
    %v132 = vsel %vm130, %v129, 0
    %134 = vmatpush.bf16.msra.mxu0 0
    %135 = vmatpush.bf16.msra.mxu0 0
    %136 = vmatpush.bf16.msra.mxu0 0
    %137 = vmatpush.bf16.msra.mxu0 0
    %138 = vmatpush.bf16.msra.mxu0 0
    %139 = vmatpush.bf16.msra.mxu0 0
    %140 = vmatpush.bf16.msra.mxu0 %v112
    %141 = vmatpush.bf16.msra.mxu0 %v111
    %142 = vmatmul.bf16.gmra.mxu0 %v132
    %v143 = vpop.f32.mrf.mxu0
    %v144 = vadd.f32 %v118, %v143
    %v145 = vpop.f32.mrf.mxu0
    %v146 = vadd.f32 %v123, %v145
    %147 = vdwg.mxu0
    %148 = vst [vmem:[#allocation2] sm:$0xff] %v144
    %149 = vst [vmem:[#allocation2 + $0x8] sm:$0xff] %v146
    // Predicated region
    $region22: #{tpu_custom_call.1} parent=1 // pred_check
      _
    $region23: #{tpu_custom_call.1} parent=1 // pred_check_branch
      %151 = sbr.rel (0) target = $region25
    $region24: #{tpu_custom_call.1} parent=1 // pred_region
      %153 = vsyncadd [#allocation3], 0
      %s154 = sshll.u32 [#allocation2], 4
      %s155 = int_to_ptr.vmem [resolvable:$true] %s154
      %s156 = sshll.u32 %s5, 4
      %s157 = int_to_ptr.hbm [resolvable:$true] %s156
      %162 = dma.vmem_to_hbm [thread:$0]  %s155, 256, %s157, [#allocation3], 128, 128, 8
    $region25: #{tpu_custom_call.1} parent=1 // pred_fallthru
      _
    // Predicated region
    $region26: #{tpu_custom_call.1} parent=1 // pred_check
      _
    $region27: #{tpu_custom_call.1} parent=1 // pred_check_branch
      %164 = sbr.rel (0) target = $region29
    $region28: #{tpu_custom_call.1} parent=1 // pred_region
      %166 = dma.done [#allocation3], 256
    $region29: #{tpu_custom_call.1} parent=1 // pred_fallthru
      _
    %167 = vsyncpa [#allocation3], 1

</llo_original>
